<compile_context>
chip_gen: v7x
topology: tpu7x:2x2x1
jax: 0.10.0
libtpu: 0.0.40
codegen_flags: <defaults>
</compile_context>

<pallas_src>
import jax
import jax.numpy as jnp
from jax.experimental import pallas as pl
from jax.experimental.pallas import tpu as pltpu


# ----------------------------- Pallas kernel ------------------------------- #

def _solenoidal_field_kernel(df_ref, o_ref):
    # df_ref / o_ref : (TILE_R, N) tiles of the flattened gradient (N = n_embd, even).
    df = df_ref[...]
    half = df.shape[-1] // 2
    # dF2 @ M.T  ==  [ dF2[:, half:] , -dF2[:, :half] ]   (canonical symplectic M)
    o_ref[...] = jnp.concatenate([df[:, half:], -df[:, :half]], axis=-1)


def _pick_tile_r(n_rows, n_embd, itemsize, vmem_budget_bytes=8 << 20):
    """Largest row tile keeping ~4 resident tiles (double-buffered in + out) in budget."""
    max_rows = max(8, vmem_budget_bytes // (4 * n_embd * itemsize))
    tile = min(n_rows, max_rows, 2048)
    if tile < n_rows:
        tile = max(8, (tile // 8) * 8)  # keep the sublane dim 8-aligned
    return tile


def solenoidal_field_pallas(df2_2d, *, tile_r=None):
    """Compute df2_2d @ M.T for canonical M = [[0, I], [-I, 0]] as a swap+negate stream."""
    n_rows, n_embd = df2_2d.shape
    if n_embd % 2 != 0:
        raise ValueError("n_embd must be even for canonical coordinates")
    if tile_r is None:
        tile_r = _pick_tile_r(n_rows, n_embd, df2_2d.dtype.itemsize)

    bytes_per_pass = n_rows * n_embd * df2_2d.dtype.itemsize
    return pl.pallas_call(
        _solenoidal_field_kernel,
        out_shape=jax.ShapeDtypeStruct((n_rows, n_embd), df2_2d.dtype),
        grid=(pl.cdiv(n_rows, tile_r),),
        in_specs=[pl.BlockSpec((tile_r, n_embd), lambda i: (i, 0))],
        out_specs=pl.BlockSpec((tile_r, n_embd), lambda i: (i, 0)),
        input_output_aliases={0: 0},  # swap in place at the HBM level (no extra buffer)
        compiler_params=pltpu.CompilerParams(
            dimension_semantics=("parallel",),  # independent row tiles -> megacore sharding
        ),
        cost_estimate=pl.CostEstimate(
            flops=n_rows * n_embd,          # the sign flips
            transcendentals=0,
            bytes_accessed=2 * bytes_per_pass,  # one read + one write pass over dF2
        ),
    )(df2_2d)


# --------------------------- Module equivalent ----------------------------- #

def permutation_tensor(n):
    """M = cat([I[n//2:], -I[:n//2]])  ==  [[0, I], [-I, 0]] (used only for the reference check)."""
    eye = jnp.eye(n, dtype=jnp.float32)
    return jnp.concatenate([eye[n // 2:], -eye[: n // 2]], axis=0)


def time_derivative_forward(x, f1_fn, f2_fn, n_embd):
    """
    Equivalent of Time_Derivative.forward(x, F1, F2) with the module defaults
    (field_type='solenoidal', assume_canonical_coords=True).

    f1_fn / f2_fn: differentiable functions producing the potentials F1 / F2 from x
    (stand-in for the PyTorch autograd graph). F1 is unused in the solenoidal branch,
    matching the reference.
    """
    del f1_fn  # conservative branch is skipped for field_type == 'solenoidal'

    # TODO(synk): torch.autograd.grad has no in-kernel Pallas equivalent; the gradient
    # of the external F2 graph is computed with jax.grad at the JAX level.
    dF2 = jax.grad(lambda xx: jnp.sum(f2_fn(xx).astype(xx.dtype)))(x)

    total_field_2d = solenoidal_field_pallas(dF2.reshape(-1, n_embd))
    return total_field_2d.reshape(x.shape)


# --------------------------------- Demo ------------------------------------ #

if __name__ == "__main__":
    B, T, N_EMBD = 2, 8, 32  # small shapes; n_embd must be even (canonical coords)

    key = jax.random.PRNGKey(0)
    kx, kw1, kw2 = jax.random.split(key, 3)

    x = jax.random.normal(kx, (B, T, N_EMBD), dtype=jnp.float32)

    # Deterministic synthetic potential networks producing F1 / F2 from x.
    w1 = jax.random.normal(kw1, (N_EMBD,), dtype=jnp.float32) * 0.1
    w2 = jax.random.normal(kw2, (N_EMBD,), dtype=jnp.float32) * 0.1

    def f1_fn(xx):  # V potential (unused in solenoidal branch)
        return jnp.sum(jnp.tanh(xx) * w1, axis=-1)

    def f2_fn(xx):  # H potential
        return jnp.sum(jnp.sin(xx) * w2 + 0.5 * xx * xx, axis=-1)

    fwd = jax.jit(lambda xx: time_derivative_forward(xx, f1_fn, f2_fn, N_EMBD))
    total_field = jax.block_until_ready(fwd(x))

    # Pure-JAX reference: the original matmul form against the true M.
    dF2_ref = jax.grad(lambda xx: jnp.sum(f2_fn(xx)))(x)
    ref = dF2_ref @ permutation_tensor(N_EMBD).T

    assert total_field.shape == x.shape
    assert total_field.dtype == x.dtype
    assert jnp.allclose(total_field, ref, atol=1e-5, rtol=1e-5)

    print("KERNEL_OK")
</pallas_src>

<mosaic_0001>
module attributes {stable_mosaic.version = 11 : i64} {
  func.func @_solenoidal_field_kernel(%arg0: i32, %arg1: memref<16x32xf32, #tpu.memory_space<vmem>>, %arg2: memref<16x32xf32, #tpu.memory_space<vmem>>) attributes {dimension_semantics = [#tpu.dimension_semantics<parallel>], iteration_bounds = array<i64: 1>, scalar_prefetch = 0 : i64, scratch_operands = 0 : i64, tpu.core_type = #tpu.core_type<tc>, window_params = [{transform_indices = @transform_0, window_bounds = array<i64: 16, 32>}, {transform_indices = @transform_1, window_bounds = array<i64: 16, 32>}]} {
    %c0 = arith.constant 0 : index
    %c0_0 = arith.constant 0 : index
    %0 = vector.load %arg1[%c0, %c0_0] : memref<16x32xf32, #tpu.memory_space<vmem>>, vector<16x32xf32>
    %1 = vector.extract_strided_slice %0 {offsets = [0, 16], sizes = [16, 16], strides = [1, 1]} : vector<16x32xf32> to vector<16x16xf32>
    %2 = vector.extract_strided_slice %0 {offsets = [0, 0], sizes = [16, 16], strides = [1, 1]} : vector<16x32xf32> to vector<16x16xf32>
    %cst = arith.constant 0.000000e+00 : f32
    %3 = vector.broadcast %cst : f32 to vector<16x16xf32>
    %4 = arith.subf %3, %2 : vector<16x16xf32>
    %5 = tpu.concatenate %1, %4 in 1 : vector<16x16xf32>, vector<16x16xf32> -> vector<16x32xf32>
    %c0_1 = arith.constant 0 : index
    %c0_2 = arith.constant 0 : index
    %6 = vector.load %arg2[%c0_1, %c0_2] : memref<16x32xf32, #tpu.memory_space<vmem>>, vector<16x32xf32>
    tpu.vector_store %arg2[%c0_1, %c0_2], %5 {strides = array<i32>} : memref<16x32xf32, #tpu.memory_space<vmem>>, vector<16x32xf32>,
    return
  }
  func.func @transform_0(%arg0: i32) -> (i32, i32) {
    %c0_i32 = arith.constant 0 : i32
    %c0_i32_0 = arith.constant 0 : i32
    return %arg0, %c0_i32 : i32, i32
  }
  func.func @transform_1(%arg0: i32) -> (i32, i32) {
    %c0_i32 = arith.constant 0 : i32
    %c0_i32_0 = arith.constant 0 : i32
    return %arg0, %c0_i32 : i32, i32
  }
}

</mosaic_0001>

<llo_original>
// kernel: _lambda_.1
$region0: #{_lambda_.1}
  #allocation0 [shape = 'u32[]', space=smem, size = 0x4, offset = 0x4, fixed_abs, tag = 'smem constant byte address 0x4 - core index']
  #allocation1 [shape = 'u32[144,128]{1,0:T(1,128)}', space=vmem, size = 0x12000, scoped, tag = 'internal scratch']
  %s0 = inlined_call_operand.vmem [shape: f32[16,32], index: 0, kind: input, shape index: {}, may-alias: {0,1}]
  %s1 = inlined_call_operand.vmem [shape: f32[16,32], index: 1, kind: output, shape index: {}, may-alias: {0,1}]
  %s2 = sld [smem:[#allocation0]]
  $region14: #{_lambda_.1} parent=0
    _
  %s4 = ssub.s32 1, %s2
  %s5 = scalar_select 0, %s4, %s2
  // Predicated region
  $region2: #{_lambda_.1} parent=0 // pred_check
    _
  $region3: #{_lambda_.1} parent=0 // pred_check_branch
    %7 = sbr.rel (0) target = $region5
  $region4: #{_lambda_.1} parent=0 // pred_region
    _
  $region5: #{_lambda_.1} parent=0 // pred_fallthru
    _
  %v8 = vld [vmem:[%s0] sm:$0xff]
  %v9 = vld [vmem:[%s0 + $0x8] sm:$0xff]
  %v10 = vsub.f32 0.0, %v8
  %v11 = vsub.f32 0.0, %v9
  %14 = vrot.lane.b32.xlu0 %v8, 112
  %v15 = vpop.permute.xlu0 %14
  %16 = vrot.lane.b32.xlu0 %v9, 112
  %v17 = vpop.permute.xlu0 %16
  %22 = vrot.lane.b32.xlu0 %v10, 16
  %v23 = vpop.permute.xlu0 %22
  %24 = vrot.lane.b32.xlu0 %v11, 16
  %v25 = vpop.permute.xlu0 %24
  %vm28 = vcmask 130048
  %v29 = vsel %vm28, %v15, %v23
  %v30 = vsel %vm28, %v17, %v25
  %vm31 = vcmask 261120
  %32 = vst.msk [vmem:[%s1] sm:$0xff] %vm31, %v29
  %33 = vst.msk [vmem:[%s1 + $0x8] sm:$0xff] %vm31, %v30
  // Predicated region
  $region6: #{_lambda_.1} parent=0 // pred_check
    _
  $region7: #{_lambda_.1} parent=0 // pred_check_branch
    %35 = sbr.rel (0) target = $region9
  $region8: #{_lambda_.1} parent=0 // pred_region
    _
  $region9: #{_lambda_.1} parent=0 // pred_fallthru
    _
  // Predicated region
  $region10: #{_lambda_.1} parent=0 // pred_check
    _
  $region11: #{_lambda_.1} parent=0 // pred_check_branch
    %37 = sbr.rel (0) target = $region13
  $region12: #{_lambda_.1} parent=0 // pred_region
    _
  $region13: #{_lambda_.1} parent=0 // pred_fallthru
    _

</llo_original>
